<compile_context>
chip_gen: v7x
topology: tpu7x:2x2x1
jax: 0.10.0
libtpu: 0.0.40
codegen_flags: <defaults>
</compile_context>

<pallas_src>
import functools

import jax
import jax.numpy as jnp
from jax.experimental import pallas as pl
from jax.experimental.pallas import tpu as pltpu

KERNEL_MUL = 2.0
KERNEL_NUM = 5


def _round_up(x, m):
    return (x + m - 1) // m * m


def _pick_tile(d):
    """Largest N-axis tile whose double-buffered bf16 row/col blocks plus the
    f32 (tile, tile) intermediates stay well inside the default ~32 MiB scoped
    VMEM (safe on v5e / v6e / v7x)."""
    for tile in (512, 256, 128):
        need = 2 * 2 * tile * d * 2 + 6 * tile * tile * 4
        if need <= 20 * 1024 * 1024:
            return tile
    # TODO(synk): for very large D, add a contraction (D) grid axis with a
    # (tile, tile) f32 VMEM scratch instead of full-D blocks (v7x VMEM budget).
    return 128


def _mmd_tile_kernel(ti_ref, tj_ref, rows_ref, colsT_ref, sqr_ref, sqc_ref,
                     wr_ref, wc_ref, out_ref, *, tile, kernel_num):
    t = pl.program_id(0)
    ti = ti_ref[t]
    tj = tj_ref[t]

    # Gram block on the MXU: bf16 operands, f32 accumulate.  colsT is
    # pre-scaled by -2/bw_widest and sqr/sqc by -1/bw_widest in the wrapper,
    # so x == -l2 / bw_widest with zero extra in-kernel multiplies.
    gram = jnp.dot(rows_ref[...], colsT_ref[...],
                   preferred_element_type=jnp.float32)            # (tile, tile)
    x = sqr_ref[...] + sqc_ref[...] + gram                        # (tile,1)+(1,tile)+(tile,tile)
    x = jnp.minimum(x, 0.0)                                       # clamp round-off (l2 >= 0)

    # Multi-bandwidth Gaussian sum: ONE EUP exp (widest bandwidth) then
    # repeated VPU squarings (successive bandwidths differ by exactly 2x).
    e = jnp.exp(x)
    acc = e
    k = e
    for _ in range(kernel_num - 1):
        k = k * k
        acc = acc + k

    # Signed (+1 same-half / -1 cross-half) and padding-zeroing weights as two
    # broadcast multiplies with precomputed vectors (no iota / compares).
    w = acc * wr_ref[...] * wc_ref[...]

    # Deferred reduction: tree-add the weighted tile down to one (8, 128) f32
    # vreg using pure VPU adds (static, vreg-aligned slices); the cross-lane
    # reduce happens once in the wrapper over all tiles.
    part = jnp.zeros((8, 128), dtype=jnp.float32)
    for r0 in range(0, tile, 8):
        for c0 in range(0, tile, 128):
            part = part + w[r0:r0 + 8, c0:c0 + 128]

    # Symmetry: only j >= i tiles are visited; off-diagonal tiles also stand in
    # for their transposed twin.
    factor = jnp.where(ti == tj, jnp.float32(1.0), jnp.float32(2.0))
    out_ref[...] = (part * factor)[None, :, :]


def mmd_pallas(source, target, kernel_mul=KERNEL_MUL, kernel_num=KERNEL_NUM,
               block=None):
    assert source.shape == target.shape and source.ndim == 2
    # Repeated-squaring Gaussian chain relies on the (default) bandwidth ratio.
    assert kernel_mul == 2.0, "mmd_pallas assumes kernel_mul == 2.0 (DAN default)"
    B, D = source.shape
    N = 2 * B

    # Concat once, outside the kernel; mean-center (pairwise distances are
    # translation invariant) for a numerically stable closed-form bandwidth
    # and better bf16 Gram accuracy.
    total = jnp.concatenate([source, target], axis=0).astype(jnp.float32)   # (N, D)
    total = total - jnp.mean(total, axis=0, keepdims=True)

    # O(N*D) prologue: squared row norms + closed-form sum(L2) for the bandwidth.
    sq = jnp.sum(total * total, axis=1)                                     # (N,)
    col_sum = jnp.sum(total, axis=0)                                        # ~0 after centering
    sum_l2 = 2.0 * N * jnp.sum(sq) - 2.0 * jnp.sum(col_sum * col_sum)
    bandwidth = sum_l2 / jnp.float32(N * N - N)
    bandwidth = bandwidth / jnp.float32(kernel_mul ** (kernel_num // 2))
    # TODO(synk): bandwidth == 0 (all rows identical) yields NaN, matching the
    # PyTorch reference; add a jnp.maximum(bandwidth, eps) guard if degenerate
    # inputs are possible.
    neg_inv = -1.0 / (bandwidth * jnp.float32(kernel_mul ** (kernel_num - 1)))  # -1/bw_widest

    # Tile / pad the N axis.
    if block is not None:
        assert block % 128 == 0, "block override must be a multiple of 128"
        tile = int(block)
    else:
        tile = _pick_tile(D)
    if N <= tile:
        tile = max(128, _round_up(N, 128))       # lane-dense single tile
    n_pad = _round_up(N, tile)
    pad = n_pad - N
    n_i = n_pad // tile

    total_p = jnp.pad(total, ((0, pad), (0, 0)))                       # (n_pad, D) f32
    rows_bf = total_p.astype(jnp.bfloat16)                             # (n_pad, D) bf16
    colsT_bf = ((-2.0 * neg_inv) * total_p).T.astype(jnp.bfloat16)     # (D, n_pad) bf16, pre-scaled

    sq_scaled = jnp.pad(sq, (0, pad)) * neg_inv                        # (n_pad,) f32, pre-scaled
    sq_row = sq_scaled.reshape(n_pad, 1)
    sq_col = sq_scaled.reshape(1, n_pad)

    # Signed/valid weight vector: +1 source half, -1 target half, 0 padding.
    idx = jnp.arange(n_pad)
    s = jnp.where(idx < N, jnp.where(idx < B, 1.0, -1.0), 0.0).astype(jnp.float32)
    w_row = s.reshape(n_pad, 1)
    w_col = s.reshape(1, n_pad)

    # Flattened upper-triangular tile list (j >= i), fed via scalar prefetch.
    pairs = [(i, j) for i in range(n_i) for j in range(i, n_i)]
    num_tiles = len(pairs)
    tile_i = jnp.asarray([p[0] for p in pairs], dtype=jnp.int32)
    tile_j = jnp.asarray([p[1] for p in pairs], dtype=jnp.int32)

    grid_spec = pltpu.PrefetchScalarGridSpec(
        num_scalar_prefetch=2,
        grid=(num_tiles,),
        in_specs=[
            pl.BlockSpec((tile, D), lambda t, ti, tj: (ti[t], 0)),     # row block (bf16)
            pl.BlockSpec((D, tile), lambda t, ti, tj: (0, tj[t])),     # col block (bf16, scaled)
            pl.BlockSpec((tile, 1), lambda t, ti, tj: (ti[t], 0)),     # scaled row norms
            pl.BlockSpec((1, tile), lambda t, ti, tj: (0, tj[t])),     # scaled col norms
            pl.BlockSpec((tile, 1), lambda t, ti, tj: (ti[t], 0)),     # signed row weights
            pl.BlockSpec((1, tile), lambda t, ti, tj: (0, tj[t])),     # signed col weights
        ],
        out_specs=pl.BlockSpec((1, 8, 128), lambda t, ti, tj: (t, 0, 0)),
    )

    partials = pl.pallas_call(
        functools.partial(_mmd_tile_kernel, tile=tile, kernel_num=kernel_num),
        out_shape=jax.ShapeDtypeStruct((num_tiles, 8, 128), jnp.float32),
        grid_spec=grid_spec,
        compiler_params=pltpu.CompilerParams(
            dimension_semantics=("parallel",),   # uniform-cost tiles -> balanced on v7x 2-TC
            vmem_limit_bytes=48 * 1024 * 1024,
        ),
    )(tile_i, tile_j, rows_bf, colsT_bf, sq_row, sq_col, w_row, w_col)

    # Per-tile (8,128) vector partials, reduced once outside the kernel.
    return jnp.sum(partials) / jnp.float32(B * B)


class MmdLoss:
    """Mirror of the PyTorch module: holds source/target, forward() -> scalar."""

    def __init__(self, source, target):
        self.source = source
        self.target = target

    def forward(self):
        return mmd_pallas(self.source, self.target)


def _mmd_ref(source, target, kernel_mul=KERNEL_MUL, kernel_num=KERNEL_NUM):
    """Pure-JAX reference (direct O(N^2 D) formulation) for a sanity check."""
    b = source.shape[0]
    total = jnp.concatenate([source, target], axis=0).astype(jnp.float32)
    n = total.shape[0]
    diff = total[None, :, :] - total[:, None, :]
    l2 = jnp.sum(diff * diff, axis=-1)
    bw = jnp.sum(l2) / (n * n - n)
    bw = bw / (kernel_mul ** (kernel_num // 2))
    k = sum(jnp.exp(-l2 / (bw * kernel_mul ** i)) for i in range(kernel_num))
    return jnp.mean(k[:b, :b] + k[b:, b:] - k[:b, b:] - k[b:, :b])


def _check(loss, ref):
    assert jnp.isfinite(loss), loss
    # bf16 Gram operands -> relaxed tolerance vs the f32 reference.
    assert jnp.allclose(loss, ref, rtol=1e-2, atol=2e-4), (loss, ref)


if __name__ == "__main__":
    key = jax.random.PRNGKey(0)
    k1, k2, k3, k4, k5, k6 = jax.random.split(key, 6)

    # Small case (single lane-dense tile): batch of 8 feature vectors, width 32.
    B, D = 8, 32
    source = jax.random.normal(k1, (B, D), dtype=jnp.float32)
    target = jax.random.normal(k2, (B, D), dtype=jnp.float32) + 0.5
    loss = jax.block_until_ready(MmdLoss(source, target).forward())
    ref = jax.block_until_ready(_mmd_ref(source, target))
    _check(loss, ref)

    # Forced small block: exercises the triangular multi-tile grid, the
    # off-diagonal 2x symmetry factor, half-boundary masking and padding.
    B2, D2 = 160, 64
    source2 = jax.random.normal(k3, (B2, D2), dtype=jnp.float32)
    target2 = jax.random.normal(k4, (B2, D2), dtype=jnp.float32) + 0.25
    loss2 = jax.block_until_ready(mmd_pallas(source2, target2, block=128))
    ref2 = jax.block_until_ready(_mmd_ref(source2, target2))
    _check(loss2, ref2)

    # Default tile-pick path with multiple row tiles + padding.
    B3, D3 = 288, 32
    source3 = jax.random.normal(k5, (B3, D3), dtype=jnp.float32)
    target3 = jax.random.normal(k6, (B3, D3), dtype=jnp.float32) + 0.25
    loss3 = jax.block_until_ready(MmdLoss(source3, target3).forward())
    ref3 = jax.block_until_ready(_mmd_ref(source3, target3))
    _check(loss3, ref3)

    print("KERNEL_OK")
</pallas_src>

<mosaic_0001>
module attributes {stable_mosaic.version = 11 : i64} {
  func.func @_mmd_tile_kernel(%arg0: i32, %arg1: memref<1xi32, #tpu.memory_space<smem>>, %arg2: memref<1xi32, #tpu.memory_space<smem>>, %arg3: memref<128x32xbf16, #tpu.memory_space<vmem>>, %arg4: memref<32x128xbf16, #tpu.memory_space<vmem>>, %arg5: memref<128x1xf32, #tpu.memory_space<vmem>>, %arg6: memref<1x128xf32, #tpu.memory_space<vmem>>, %arg7: memref<128x1xf32, #tpu.memory_space<vmem>>, %arg8: memref<1x128xf32, #tpu.memory_space<vmem>>, %arg9: memref<1x8x128xf32, #tpu.memory_space<vmem>>) attributes {dimension_semantics = [#tpu.dimension_semantics<parallel>], iteration_bounds = array<i64: 1>, scalar_prefetch = 2 : i64, scratch_operands = 0 : i64, tpu.core_type = #tpu.core_type<tc>, window_params = [{transform_indices = @transform_0, window_bounds = array<i64: 128, 32>}, {transform_indices = @transform_1, window_bounds = array<i64: 32, 128>}, {transform_indices = @transform_2, window_bounds = array<i64: 128, 1>}, {transform_indices = @transform_3, window_bounds = array<i64: 1, 128>}, {transform_indices = @transform_4, window_bounds = array<i64: 128, 1>}, {transform_indices = @transform_5, window_bounds = array<i64: 1, 128>}, {transform_indices = @transform_6, window_bounds = array<i64: 1, 8, 128>}]} {
    %0 = arith.index_cast %arg0 : i32 to index
    %1 = memref.load %arg1[%0] : memref<1xi32, #tpu.memory_space<smem>>
    %2 = arith.index_cast %arg0 : i32 to index
    %3 = memref.load %arg2[%2] : memref<1xi32, #tpu.memory_space<smem>>
    %c0 = arith.constant 0 : index
    %c0_0 = arith.constant 0 : index
    %4 = vector.load %arg3[%c0, %c0_0] : memref<128x32xbf16, #tpu.memory_space<vmem>>, vector<128x32xbf16>
    %c0_1 = arith.constant 0 : index
    %c0_2 = arith.constant 0 : index
    %5 = vector.load %arg4[%c0_1, %c0_2] : memref<32x128xbf16, #tpu.memory_space<vmem>>, vector<32x128xbf16>
    %cst = arith.constant dense<0.000000e+00> : vector<128x128xf32>
    %6 = tpu.matmul %4, %5, %cst {dimension_numbers = #tpu.dot_dimension_numbers<[1], [0], [0], [1], [0, 0, 1, 1], [], []>} : vector<128x32xbf16>, vector<32x128xbf16>, vector<128x128xf32> -> vector<128x128xf32>
    %c0_3 = arith.constant 0 : index
    %c0_4 = arith.constant 0 : index
    %7 = vector.load %arg5[%c0_3, %c0_4] : memref<128x1xf32, #tpu.memory_space<vmem>>, vector<128x1xf32>
    %c0_5 = arith.constant 0 : index
    %c0_6 = arith.constant 0 : index
    %8 = vector.load %arg6[%c0_5, %c0_6] : memref<1x128xf32, #tpu.memory_space<vmem>>, vector<1x128xf32>
    %9 = vector.broadcast %7 : vector<128x1xf32> to vector<128x128xf32>
    %10 = vector.broadcast %8 : vector<1x128xf32> to vector<128x128xf32>
    %11 = arith.addf %9, %10 : vector<128x128xf32>
    %12 = arith.addf %11, %6 : vector<128x128xf32>
    %cst_7 = arith.constant 0.000000e+00 : f32
    %13 = vector.broadcast %cst_7 : f32 to vector<128x128xf32>
    %14 = arith.minimumf %12, %13 : vector<128x128xf32>
    %15 = math.exp %14 : vector<128x128xf32>
    %16 = arith.mulf %15, %15 : vector<128x128xf32>
    %17 = arith.addf %15, %16 : vector<128x128xf32>
    %18 = arith.mulf %16, %16 : vector<128x128xf32>
    %19 = arith.addf %17, %18 : vector<128x128xf32>
    %20 = arith.mulf %18, %18 : vector<128x128xf32>
    %21 = arith.addf %19, %20 : vector<128x128xf32>
    %22 = arith.mulf %20, %20 : vector<128x128xf32>
    %23 = arith.addf %21, %22 : vector<128x128xf32>
    %c0_8 = arith.constant 0 : index
    %c0_9 = arith.constant 0 : index
    %24 = vector.load %arg7[%c0_8, %c0_9] : memref<128x1xf32, #tpu.memory_space<vmem>>, vector<128x1xf32>
    %25 = vector.broadcast %24 : vector<128x1xf32> to vector<128x128xf32>
    %26 = arith.mulf %23, %25 : vector<128x128xf32>
    %c0_10 = arith.constant 0 : index
    %c0_11 = arith.constant 0 : index
    %27 = vector.load %arg8[%c0_10, %c0_11] : memref<1x128xf32, #tpu.memory_space<vmem>>, vector<1x128xf32>
    %28 = vector.broadcast %27 : vector<1x128xf32> to vector<128x128xf32>
    %29 = arith.mulf %26, %28 : vector<128x128xf32>
    %cst_12 = arith.constant 0.000000e+00 : f32
    %30 = vector.broadcast %cst_12 : f32 to vector<8x128xf32>
    %31 = vector.extract_strided_slice %29 {offsets = [0, 0], sizes = [8, 128], strides = [1, 1]} : vector<128x128xf32> to vector<8x128xf32>
    %32 = arith.addf %30, %31 : vector<8x128xf32>
    %33 = vector.extract_strided_slice %29 {offsets = [8, 0], sizes = [8, 128], strides = [1, 1]} : vector<128x128xf32> to vector<8x128xf32>
    %34 = arith.addf %32, %33 : vector<8x128xf32>
    %35 = vector.extract_strided_slice %29 {offsets = [16, 0], sizes = [8, 128], strides = [1, 1]} : vector<128x128xf32> to vector<8x128xf32>
    %36 = arith.addf %34, %35 : vector<8x128xf32>
    %37 = vector.extract_strided_slice %29 {offsets = [24, 0], sizes = [8, 128], strides = [1, 1]} : vector<128x128xf32> to vector<8x128xf32>
    %38 = arith.addf %36, %37 : vector<8x128xf32>
    %39 = vector.extract_strided_slice %29 {offsets = [32, 0], sizes = [8, 128], strides = [1, 1]} : vector<128x128xf32> to vector<8x128xf32>
    %40 = arith.addf %38, %39 : vector<8x128xf32>
    %41 = vector.extract_strided_slice %29 {offsets = [40, 0], sizes = [8, 128], strides = [1, 1]} : vector<128x128xf32> to vector<8x128xf32>
    %42 = arith.addf %40, %41 : vector<8x128xf32>
    %43 = vector.extract_strided_slice %29 {offsets = [48, 0], sizes = [8, 128], strides = [1, 1]} : vector<128x128xf32> to vector<8x128xf32>
    %44 = arith.addf %42, %43 : vector<8x128xf32>
    %45 = vector.extract_strided_slice %29 {offsets = [56, 0], sizes = [8, 128], strides = [1, 1]} : vector<128x128xf32> to vector<8x128xf32>
    %46 = arith.addf %44, %45 : vector<8x128xf32>
    %47 = vector.extract_strided_slice %29 {offsets = [64, 0], sizes = [8, 128], strides = [1, 1]} : vector<128x128xf32> to vector<8x128xf32>
    %48 = arith.addf %46, %47 : vector<8x128xf32>
    %49 = vector.extract_strided_slice %29 {offsets = [72, 0], sizes = [8, 128], strides = [1, 1]} : vector<128x128xf32> to vector<8x128xf32>
    %50 = arith.addf %48, %49 : vector<8x128xf32>
    %51 = vector.extract_strided_slice %29 {offsets = [80, 0], sizes = [8, 128], strides = [1, 1]} : vector<128x128xf32> to vector<8x128xf32>
    %52 = arith.addf %50, %51 : vector<8x128xf32>
    %53 = vector.extract_strided_slice %29 {offsets = [88, 0], sizes = [8, 128], strides = [1, 1]} : vector<128x128xf32> to vector<8x128xf32>
    %54 = arith.addf %52, %53 : vector<8x128xf32>
    %55 = vector.extract_strided_slice %29 {offsets = [96, 0], sizes = [8, 128], strides = [1, 1]} : vector<128x128xf32> to vector<8x128xf32>
    %56 = arith.addf %54, %55 : vector<8x128xf32>
    %57 = vector.extract_strided_slice %29 {offsets = [104, 0], sizes = [8, 128], strides = [1, 1]} : vector<128x128xf32> to vector<8x128xf32>
    %58 = arith.addf %56, %57 : vector<8x128xf32>
    %59 = vector.extract_strided_slice %29 {offsets = [112, 0], sizes = [8, 128], strides = [1, 1]} : vector<128x128xf32> to vector<8x128xf32>
    %60 = arith.addf %58, %59 : vector<8x128xf32>
    %61 = vector.extract_strided_slice %29 {offsets = [120, 0], sizes = [8, 128], strides = [1, 1]} : vector<128x128xf32> to vector<8x128xf32>
    %62 = arith.addf %60, %61 : vector<8x128xf32>
    %63 = arith.cmpi eq, %1, %3 : i32
    %cst_13 = arith.constant 1.000000e+00 : f32
    %cst_14 = arith.constant 2.000000e+00 : f32
    %64 = arith.select %63, %cst_13, %cst_14 : f32
    %65 = vector.broadcast %64 : f32 to vector<8x128xf32>
    %66 = arith.mulf %62, %65 : vector<8x128xf32>
    %67 = vector.shape_cast %66 : vector<8x128xf32> to vector<1x8x128xf32>
    %c0_15 = arith.constant 0 : index
    %c0_16 = arith.constant 0 : index
    %c0_17 = arith.constant 0 : index
    %68 = vector.load %arg9[%c0_15, %c0_16, %c0_17] : memref<1x8x128xf32, #tpu.memory_space<vmem>>, vector<1x8x128xf32>
    tpu.vector_store %arg9[%c0_15, %c0_16, %c0_17], %67 {strides = array<i32>} : memref<1x8x128xf32, #tpu.memory_space<vmem>>, vector<1x8x128xf32>,
    return
  }
  func.func @transform_0(%arg0: i32, %arg1: memref<1xi32, #tpu.memory_space<smem>>, %arg2: memref<1xi32, #tpu.memory_space<smem>>) -> (i32, i32) {
    %0 = arith.index_cast %arg0 : i32 to index
    %1 = memref.load %arg1[%0] : memref<1xi32, #tpu.memory_space<smem>>
    %c0_i32 = arith.constant 0 : i32
    %c0_i32_0 = arith.constant 0 : i32
    return %1, %c0_i32 : i32, i32
  }
  func.func @transform_1(%arg0: i32, %arg1: memref<1xi32, #tpu.memory_space<smem>>, %arg2: memref<1xi32, #tpu.memory_space<smem>>) -> (i32, i32) {
    %0 = arith.index_cast %arg0 : i32 to index
    %1 = memref.load %arg2[%0] : memref<1xi32, #tpu.memory_space<smem>>
    %c0_i32 = arith.constant 0 : i32
    %c0_i32_0 = arith.constant 0 : i32
    return %c0_i32, %1 : i32, i32
  }
  func.func @transform_2(%arg0: i32, %arg1: memref<1xi32, #tpu.memory_space<smem>>, %arg2: memref<1xi32, #tpu.memory_space<smem>>) -> (i32, i32) {
    %0 = arith.index_cast %arg0 : i32 to index
    %1 = memref.load %arg1[%0] : memref<1xi32, #tpu.memory_space<smem>>
    %c0_i32 = arith.constant 0 : i32
    %c0_i32_0 = arith.constant 0 : i32
    return %1, %c0_i32 : i32, i32
  }
  func.func @transform_3(%arg0: i32, %arg1: memref<1xi32, #tpu.memory_space<smem>>, %arg2: memref<1xi32, #tpu.memory_space<smem>>) -> (i32, i32) {
    %0 = arith.index_cast %arg0 : i32 to index
    %1 = memref.load %arg2[%0] : memref<1xi32, #tpu.memory_space<smem>>
    %c0_i32 = arith.constant 0 : i32
    %c0_i32_0 = arith.constant 0 : i32
    return %c0_i32, %1 : i32, i32
  }
  func.func @transform_4(%arg0: i32, %arg1: memref<1xi32, #tpu.memory_space<smem>>, %arg2: memref<1xi32, #tpu.memory_space<smem>>) -> (i32, i32) {
    %0 = arith.index_cast %arg0 : i32 to index
    %1 = memref.load %arg1[%0] : memref<1xi32, #tpu.memory_space<smem>>
    %c0_i32 = arith.constant 0 : i32
    %c0_i32_0 = arith.constant 0 : i32
    return %1, %c0_i32 : i32, i32
  }
  func.func @transform_5(%arg0: i32, %arg1: memref<1xi32, #tpu.memory_space<smem>>, %arg2: memref<1xi32, #tpu.memory_space<smem>>) -> (i32, i32) {
    %0 = arith.index_cast %arg0 : i32 to index
    %1 = memref.load %arg2[%0] : memref<1xi32, #tpu.memory_space<smem>>
    %c0_i32 = arith.constant 0 : i32
    %c0_i32_0 = arith.constant 0 : i32
    return %c0_i32, %1 : i32, i32
  }
  func.func @transform_6(%arg0: i32, %arg1: memref<1xi32, #tpu.memory_space<smem>>, %arg2: memref<1xi32, #tpu.memory_space<smem>>) -> (i32, i32, i32) {
    %c0_i32 = arith.constant 0 : i32
    %c0_i32_0 = arith.constant 0 : i32
    %c0_i32_1 = arith.constant 0 : i32
    return %arg0, %c0_i32, %c0_i32_0 : i32, i32, i32
  }
}

</mosaic_0001>

<llo_original>
// kernel: tpu_custom_call.1
$region0: #{tpu_custom_call.1}
  #allocation0 [shape = 'u32[]', space=smem, size = 0x4, offset = 0x4, fixed_abs, tag = 'smem constant byte address 0x4 - core index']
  #allocation1 [shape = 'u32[144,128]{1,0:T(1,128)}', space=vmem, size = 0x12000, scoped, tag = 'internal scratch']
  #allocation2 [shape = 's32[1]{0}', space=sflag, size = 0x4, scoped, tag = 'scoped memory for tpu_custom_call.1']
  #allocation3 [shape = 's32[1]{0:T(128)S(6)}', space=smem, size = 0x200, scoped, tag = 'prefetched SMEM operand 0']
  #allocation4 [shape = 's32[1]{0:T(128)S(6)}', space=smem, size = 0x200, scoped, tag = 'prefetched SMEM operand 1']
  %s0 = inlined_call_operand.<no memory space> [shape: s32[1], index: 0, kind: input, shape index: {}]
  %s1 = inlined_call_operand.<no memory space> [shape: s32[1], index: 1, kind: input, shape index: {}]
  %s2 = inlined_call_operand.vmem [shape: bf16[128,32], index: 2, kind: input, shape index: {}]
  %s3 = inlined_call_operand.vmem [shape: bf16[32,128], index: 3, kind: input, shape index: {}]
  %s4 = inlined_call_operand.vmem [shape: f32[128,1], index: 4, kind: input, shape index: {}]
  %s5 = inlined_call_operand.vmem [shape: f32[1,128], index: 5, kind: input, shape index: {}]
  %s6 = inlined_call_operand.vmem [shape: f32[128,1], index: 6, kind: input, shape index: {}]
  %s7 = inlined_call_operand.vmem [shape: f32[1,128], index: 7, kind: input, shape index: {}]
  %s8 = inlined_call_operand.hbm [shape: f32[1,8,128], index: 8, kind: output, shape index: {}]
  %s9 = sld [smem:[#allocation0]]
  $region34: #{tpu_custom_call.1} parent=0
    _
  %s11 = ssub.s32 1, %s9
  %s12 = scalar_select 0, %s11, %s9
  %13 = sst [smem:[#allocation3]] %s0
  %14 = sst [smem:[#allocation4]] %s1
  $region1: #{tpu_custom_call.1} parent=0
    #allocation5 [shape = 'u8[4096]{0}', space=vmem, size = 0x1000, scoped, tag = 'output window, operand 0, single buffered']
    #allocation6 [shape = 's32[1]{0}', space=sflag, size = 0x4, scoped, tag = 'scoped memory for tpu_custom_call.1']
    %15 = vsyncpa [#allocation6], 0
    // Predicated region
    $region2: #{tpu_custom_call.1} parent=1 // pred_check
      _
    $region3: #{tpu_custom_call.1} parent=1 // pred_check_branch
      %17 = sbr.rel (0) target = $region5
    $region4: #{tpu_custom_call.1} parent=1 // pred_region
      %s18 = sld [smem:[#allocation3]]
      %s19 = smul.u32 16, %s18
      %p20 = scmp.lt.s32.totalorder %s19, 15
      %s21 = scalar_select %p20, %s19, 15
      %s22 = smul.addr %s21, 4
      %s23 = scalar_lea.vmem %s2, %s22
      %s24 = sld [smem:[#allocation3]]
      %s25 = smul.u32 16, %s24
    $region5: #{tpu_custom_call.1} parent=1 // pred_fallthru
      _
    // Predicated region
    $region6: #{tpu_custom_call.1} parent=1 // pred_check
      _
    $region7: #{tpu_custom_call.1} parent=1 // pred_check_branch
      %27 = sbr.rel (0) target = $region9
    $region8: #{tpu_custom_call.1} parent=1 // pred_region
      %s28 = sld [smem:[#allocation4]]
      %p29 = scmp.lt.s32.totalorder %s28, 0
      %s30 = scalar_select %p29, %s28, 0
      %s31 = smul.addr %s30, 4
      %s32 = scalar_lea.vmem %s3, %s31
      %s33 = sld [smem:[#allocation4]]
    $region9: #{tpu_custom_call.1} parent=1 // pred_fallthru
      _
    // Predicated region
    $region10: #{tpu_custom_call.1} parent=1 // pred_check
      _
    $region11: #{tpu_custom_call.1} parent=1 // pred_check_branch
      %35 = sbr.rel (0) target = $region13
    $region12: #{tpu_custom_call.1} parent=1 // pred_region
      %s36 = sld [smem:[#allocation3]]
      %s37 = smul.u32 16, %s36
      %p38 = scmp.lt.s32.totalorder %s37, 15
      %s39 = scalar_select %p38, %s37, 15
      %s40 = smul.addr %s39, 8
      %s41 = scalar_lea.vmem %s4, %s40
      %s42 = sld [smem:[#allocation3]]
      %s43 = smul.u32 16, %s42
    $region13: #{tpu_custom_call.1} parent=1 // pred_fallthru
      _
    // Predicated region
    $region14: #{tpu_custom_call.1} parent=1 // pred_check
      _
    $region15: #{tpu_custom_call.1} parent=1 // pred_check_branch
      %45 = sbr.rel (0) target = $region17
    $region16: #{tpu_custom_call.1} parent=1 // pred_region
      %s46 = sld [smem:[#allocation4]]
      %p47 = scmp.lt.s32.totalorder %s46, 0
      %s48 = scalar_select %p47, %s46, 0
      %s49 = scalar_lea.vmem %s5, %s48
      %s50 = sld [smem:[#allocation4]]
    $region17: #{tpu_custom_call.1} parent=1 // pred_fallthru
      _
    // Predicated region
    $region18: #{tpu_custom_call.1} parent=1 // pred_check
      _
    $region19: #{tpu_custom_call.1} parent=1 // pred_check_branch
      %52 = sbr.rel (0) target = $region21
    $region20: #{tpu_custom_call.1} parent=1 // pred_region
      %s53 = sld [smem:[#allocation3]]
      %s54 = smul.u32 16, %s53
      %p55 = scmp.lt.s32.totalorder %s54, 15
      %s56 = scalar_select %p55, %s54, 15
      %s57 = smul.addr %s56, 8
      %s58 = scalar_lea.vmem %s6, %s57
      %s59 = sld [smem:[#allocation3]]
      %s60 = smul.u32 16, %s59
    $region21: #{tpu_custom_call.1} parent=1 // pred_fallthru
      _
    // Predicated region
    $region22: #{tpu_custom_call.1} parent=1 // pred_check
      _
    $region23: #{tpu_custom_call.1} parent=1 // pred_check_branch
      %62 = sbr.rel (0) target = $region25
    $region24: #{tpu_custom_call.1} parent=1 // pred_region
      %s63 = sld [smem:[#allocation4]]
      %p64 = scmp.lt.s32.totalorder %s63, 0
      %s65 = scalar_select %p64, %s63, 0
      %s66 = scalar_lea.vmem %s7, %s65
      %s67 = sld [smem:[#allocation4]]
    $region25: #{tpu_custom_call.1} parent=1 // pred_fallthru
      _
    %s68 = sld [smem:[#allocation3]]
    %s69 = smul.u32 16, %s68
    %p70 = scmp.lt.s32.totalorder %s69, 15
    %s71 = scalar_select %p70, %s69, 15
    %s72 = smul.addr %s71, 4
    %s73 = scalar_lea.vmem %s2, %s72
    %s74 = sld [smem:[#allocation4]]
    %p75 = scmp.lt.s32.totalorder %s74, 0
    %s76 = scalar_select %p75, %s74, 0
    %s77 = smul.addr %s76, 4
    %s78 = scalar_lea.vmem %s3, %s77
    %s79 = sld [smem:[#allocation3]]
    %s80 = smul.u32 16, %s79
    %p81 = scmp.lt.s32.totalorder %s80, 15
    %s82 = scalar_select %p81, %s80, 15
    %s83 = smul.addr %s82, 8
    %s84 = scalar_lea.vmem %s4, %s83
    %s85 = sld [smem:[#allocation4]]
    %p86 = scmp.lt.s32.totalorder %s85, 0
    %s87 = scalar_select %p86, %s85, 0
    %s88 = scalar_lea.vmem %s5, %s87
    %s89 = sld [smem:[#allocation3]]
    %s90 = smul.u32 16, %s89
    %p91 = scmp.lt.s32.totalorder %s90, 15
    %s92 = scalar_select %p91, %s90, 15
    %s93 = smul.addr %s92, 8
    %s94 = scalar_lea.vmem %s6, %s93
    %s95 = sld [smem:[#allocation4]]
    %p96 = scmp.lt.s32.totalorder %s95, 0
    %s97 = scalar_select %p96, %s95, 0
    %s98 = scalar_lea.vmem %s7, %s97
    %s99 = sld [smem:[#allocation3]]
    %s100 = smul.u32 16, %s99
    %p101 = scmp.lt.s32.totalorder %s100, 15
    %s102 = scalar_select %p101, %s100, 15
    %s103 = smul.addr %s102, 4
    %s104 = scalar_lea.vmem %s2, %s103
    %s105 = sld [smem:[#allocation3]]
    %s106 = smul.u32 16, %s105
    %s107 = sld [smem:[#allocation4]]
    %p108 = scmp.lt.s32.totalorder %s107, 0
    %s109 = scalar_select %p108, %s107, 0
    %s110 = smul.addr %s109, 4
    %s111 = scalar_lea.vmem %s3, %s110
    %s112 = sld [smem:[#allocation4]]
    %s113 = sld [smem:[#allocation3]]
    %s114 = smul.u32 16, %s113
    %p115 = scmp.lt.s32.totalorder %s114, 15
    %s116 = scalar_select %p115, %s114, 15
    %s117 = smul.addr %s116, 8
    %s118 = scalar_lea.vmem %s4, %s117
    %s119 = sld [smem:[#allocation3]]
    %s120 = smul.u32 16, %s119
    %s121 = sld [smem:[#allocation4]]
    %p122 = scmp.lt.s32.totalorder %s121, 0
    %s123 = scalar_select %p122, %s121, 0
    %s124 = scalar_lea.vmem %s5, %s123
    %s125 = sld [smem:[#allocation4]]
    %s126 = sld [smem:[#allocation3]]
    %s127 = smul.u32 16, %s126
    %p128 = scmp.lt.s32.totalorder %s127, 15
    %s129 = scalar_select %p128, %s127, 15
    %s130 = smul.addr %s129, 8
    %s131 = scalar_lea.vmem %s6, %s130
    %s132 = sld [smem:[#allocation3]]
    %s133 = smul.u32 16, %s132
    %s134 = sld [smem:[#allocation4]]
    %p135 = scmp.lt.s32.totalorder %s134, 0
    %s136 = scalar_select %p135, %s134, 0
    %s137 = scalar_lea.vmem %s7, %s136
    %s138 = sld [smem:[#allocation4]]
    %s140 = sld [smem:[#allocation3]]
    %s141 = sld [smem:[#allocation4]]
    %v142 = vld [vmem:[%s104] sm:$0xf]
    %v143 = vld [vmem:[%s104 + $0x4] sm:$0xf]
    %v144 = vld [vmem:[%s104 + $0x8] sm:$0xf]
    %v145 = vld [vmem:[%s104 + $0xc] sm:$0xf]
    %v146 = vld [vmem:[%s104 + $0x10] sm:$0xf]
    %v147 = vld [vmem:[%s104 + $0x14] sm:$0xf]
    %v148 = vld [vmem:[%s104 + $0x18] sm:$0xf]
    %v149 = vld [vmem:[%s104 + $0x1c] sm:$0xf]
    %v150 = vld [vmem:[%s104 + $0x20] sm:$0xf]
    %v151 = vld [vmem:[%s104 + $0x24] sm:$0xf]
    %v152 = vld [vmem:[%s104 + $0x28] sm:$0xf]
    %v153 = vld [vmem:[%s104 + $0x2c] sm:$0xf]
    %v154 = vld [vmem:[%s104 + $0x30] sm:$0xf]
    %v155 = vld [vmem:[%s104 + $0x34] sm:$0xf]
    %v156 = vld [vmem:[%s104 + $0x38] sm:$0xf]
    %v157 = vld [vmem:[%s104 + $0x3c] sm:$0xf]
    %v158 = vld [vmem:[%s111] sm:$0xf]
    %v159 = vld [vmem:[%s111 + $0x4] sm:$0xf]
    %v160 = vld [vmem:[%s111 + $0x8] sm:$0xf]
    %v161 = vld [vmem:[%s111 + $0xc] sm:$0xf]
    %v178 = vunpack.c.l.b16 %v142
    %v179 = vunpack.c.l.b16 %v143
    %v180 = vunpack.c.l.b16 %v144
    %v181 = vunpack.c.l.b16 %v145
    %v182 = vunpack.c.l.b16 %v146
    %v183 = vunpack.c.l.b16 %v147
    %v184 = vunpack.c.l.b16 %v148
    %v185 = vunpack.c.l.b16 %v149
    %v186 = vunpack.c.l.b16 %v150
    %v187 = vunpack.c.l.b16 %v151
    %v188 = vunpack.c.l.b16 %v152
    %v189 = vunpack.c.l.b16 %v153
    %v190 = vunpack.c.l.b16 %v154
    %v191 = vunpack.c.l.b16 %v155
    %v192 = vunpack.c.l.b16 %v156
    %v193 = vunpack.c.l.b16 %v157
    %v194 = vpack.c.b16 %v179, %v178
    %v195 = vpack.c.b16 %v181, %v180
    %v196 = vpack.c.b16 %v183, %v182
    %v197 = vpack.c.b16 %v185, %v184
    %v198 = vpack.c.b16 %v187, %v186
    %v199 = vpack.c.b16 %v189, %v188
    %v200 = vpack.c.b16 %v191, %v190
    %v201 = vpack.c.b16 %v193, %v192
    %v206 = vunpack.c.l.b16 %v158
    %v207 = vunpack.c.l.b16 %v159
    %v208 = vunpack.c.l.b16 %v160
    %v209 = vunpack.c.l.b16 %v161
    %v210 = vpack.c.b16 %v207, %v206
    %v211 = vpack.c.b16 %v209, %v208
    %vm214 = vcmask 261120
    %v216 = vsel %vm214, %v194, 0
    %v219 = vsel %vm214, %v195, 0
    %v222 = vsel %vm214, %v196, 0
    %v225 = vsel %vm214, %v197, 0
    %v228 = vsel %vm214, %v198, 0
    %v231 = vsel %vm214, %v199, 0
    %v234 = vsel %vm214, %v200, 0
    %v237 = vsel %vm214, %v201, 0
    %239 = vmatprep.subr.bf16.mxu0 0
    %240 = vmatpush1.bf16.msra.mxu0 %v210
    %241 = vmatprep.subr.bf16.mxu0 0
    %242 = vmatpush1.bf16.msra.mxu0 %v211
    %243 = vmatprep.subr.bf16.mxu0 0
    %244 = vmatpush1.bf16.msra.mxu0 0
    %245 = vmatprep.subr.bf16.mxu0 0
    %246 = vmatpush1.bf16.msra.mxu0 0
    %247 = vmatprep.subr.bf16.mxu0 0
    %248 = vmatpush1.bf16.msra.mxu0 0
    %249 = vmatprep.subr.bf16.mxu0 0
    %250 = vmatpush1.bf16.msra.mxu0 0
    %251 = vmatprep.subr.bf16.mxu0 0
    %252 = vmatpush1.bf16.msra.mxu0 0
    %253 = vmatprep.subr.bf16.mxu0 0
    %254 = vmatpush1.bf16.msra.mxu0 0
    %255 = vmatprep.subr.bf16.mxu0 0
    %256 = vmatpush1.bf16.msra.mxu0 0
    %257 = vmatprep.subr.bf16.mxu0 0
    %258 = vmatpush1.bf16.msra.mxu0 0
    %259 = vmatprep.subr.bf16.mxu0 0
    %260 = vmatpush1.bf16.msra.mxu0 0
    %261 = vmatprep.subr.bf16.mxu0 0
    %262 = vmatpush1.bf16.msra.mxu0 0
    %263 = vmatprep.subr.bf16.mxu0 0
    %264 = vmatpush1.bf16.msra.mxu0 0
    %265 = vmatprep.subr.bf16.mxu0 0
    %266 = vmatpush1.bf16.msra.mxu0 0
    %267 = vmatprep.subr.bf16.mxu0 0
    %268 = vmatpush1.bf16.msra.mxu0 0
    %269 = vmatprep.subr.bf16.mxu0 0
    %270 = vmatpush1.bf16.msra.mxu0 0
    %271 = vmatprep.mubr.bf16.mxu0 0
    %272 = vmatmul.mubr.bf16.gmra.mrb[0].mxu0 %v216
    %v273 = vpop.f32.mrb[0].mxu0
    %v274 = vadd.f32 0.0, %v273
    %v275 = vpop.f32.mrb[0].mxu0
    %v276 = vpop.f32.mrb[0].mxu0
    %v277 = vadd.f32 0.0, %v276
    %v278 = vpop.f32.mrb[0].mxu0
    %279 = vmatprep.mubr.bf16.mxu0 0
    %280 = vmatmul.mubr.bf16.gmra.mrb[0].mxu0 %v219
    %v281 = vpop.f32.mrb[0].mxu0
    %v282 = vadd.f32 0.0, %v281
    %v283 = vpop.f32.mrb[0].mxu0
    %v284 = vpop.f32.mrb[0].mxu0
    %v285 = vadd.f32 0.0, %v284
    %v286 = vpop.f32.mrb[0].mxu0
    %287 = vmatprep.mubr.bf16.mxu0 0
    %288 = vmatmul.mubr.bf16.gmra.mrb[0].mxu0 %v222
    %v289 = vpop.f32.mrb[0].mxu0
    %v290 = vadd.f32 0.0, %v289
    %v291 = vpop.f32.mrb[0].mxu0
    %v292 = vpop.f32.mrb[0].mxu0
    %v293 = vadd.f32 0.0, %v292
    %v294 = vpop.f32.mrb[0].mxu0
    %295 = vmatprep.mubr.bf16.mxu0 0
    %296 = vmatmul.mubr.bf16.gmra.mrb[0].mxu0 %v225
    %v297 = vpop.f32.mrb[0].mxu0
    %v298 = vadd.f32 0.0, %v297
    %v299 = vpop.f32.mrb[0].mxu0
    %v300 = vpop.f32.mrb[0].mxu0
    %v301 = vadd.f32 0.0, %v300
    %v302 = vpop.f32.mrb[0].mxu0
    %303 = vmatprep.mubr.bf16.mxu0 0
    %304 = vmatmul.mubr.bf16.gmra.mrb[0].mxu0 %v228
    %v305 = vpop.f32.mrb[0].mxu0
    %v306 = vadd.f32 0.0, %v305
    %v307 = vpop.f32.mrb[0].mxu0
    %v308 = vpop.f32.mrb[0].mxu0
    %v309 = vadd.f32 0.0, %v308
    %v310 = vpop.f32.mrb[0].mxu0
    %311 = vmatprep.mubr.bf16.mxu0 0
    %312 = vmatmul.mubr.bf16.gmra.mrb[0].mxu0 %v231
    %v313 = vpop.f32.mrb[0].mxu0
    %v314 = vadd.f32 0.0, %v313
    %v315 = vpop.f32.mrb[0].mxu0
    %v316 = vpop.f32.mrb[0].mxu0
    %v317 = vadd.f32 0.0, %v316
    %v318 = vpop.f32.mrb[0].mxu0
    %319 = vmatprep.mubr.bf16.mxu0 0
    %320 = vmatmul.mubr.bf16.gmra.mrb[0].mxu0 %v234
    %v321 = vpop.f32.mrb[0].mxu0
    %v322 = vadd.f32 0.0, %v321
    %v323 = vpop.f32.mrb[0].mxu0
    %v324 = vpop.f32.mrb[0].mxu0
    %v325 = vadd.f32 0.0, %v324
    %v326 = vpop.f32.mrb[0].mxu0
    %327 = vmatprep.mubr.bf16.mxu0 0
    %328 = vmatmul.mubr.bf16.gmra.mrb[0].mxu0 %v237
    %v329 = vpop.f32.mrb[0].mxu0
    %v330 = vadd.f32 0.0, %v329
    %v331 = vpop.f32.mrb[0].mxu0
    %v332 = vpop.f32.mrb[0].mxu0
    %v333 = vadd.f32 0.0, %v332
    %v334 = vpop.f32.mrb[0].mxu0
    %335 = vdwg.mxu0
    %v336 = vld [vmem:[%s118] sm:$0xff]
    %v337 = vld [vmem:[%s118 + $0x8] sm:$0xff]
    %v338 = vld [vmem:[%s118 + $0x10] sm:$0xff]
    %v339 = vld [vmem:[%s118 + $0x18] sm:$0xff]
    %v340 = vld [vmem:[%s118 + $0x20] sm:$0xff]
    %v341 = vld [vmem:[%s118 + $0x28] sm:$0xff]
    %v342 = vld [vmem:[%s118 + $0x30] sm:$0xff]
    %v343 = vld [vmem:[%s118 + $0x38] sm:$0xff]
    %v344 = vld [vmem:[%s118 + $0x40] sm:$0xff]
    %v345 = vld [vmem:[%s118 + $0x48] sm:$0xff]
    %v346 = vld [vmem:[%s118 + $0x50] sm:$0xff]
    %v347 = vld [vmem:[%s118 + $0x58] sm:$0xff]
    %v348 = vld [vmem:[%s118 + $0x60] sm:$0xff]
    %v349 = vld [vmem:[%s118 + $0x68] sm:$0xff]
    %v350 = vld [vmem:[%s118 + $0x70] sm:$0xff]
    %v351 = vld [vmem:[%s118 + $0x78] sm:$0xff]
    %v352 = vld [vmem:[%s124] sm:$0x1]
    %354 = vset.pattern.permute.xlu0 0
    %355 = vperm.xlu0 %354, %v336
    %v356 = vpop.permute.xlu0 %355
    %359 = vset.pattern.permute.xlu0 0
    %360 = vperm.xlu0 %359, %v337
    %v361 = vpop.permute.xlu0 %360
    %364 = vset.pattern.permute.xlu0 0
    %365 = vperm.xlu0 %364, %v338
    %v366 = vpop.permute.xlu0 %365
    %369 = vset.pattern.permute.xlu0 0
    %370 = vperm.xlu0 %369, %v339
    %v371 = vpop.permute.xlu0 %370
    %374 = vset.pattern.permute.xlu0 0
    %375 = vperm.xlu0 %374, %v340
    %v376 = vpop.permute.xlu0 %375
    %379 = vset.pattern.permute.xlu0 0
    %380 = vperm.xlu0 %379, %v341
    %v381 = vpop.permute.xlu0 %380
    %384 = vset.pattern.permute.xlu0 0
    %385 = vperm.xlu0 %384, %v342
    %v386 = vpop.permute.xlu0 %385
    %389 = vset.pattern.permute.xlu0 0
    %390 = vperm.xlu0 %389, %v343
    %v391 = vpop.permute.xlu0 %390
    %394 = vset.pattern.permute.xlu0 0
    %395 = vperm.xlu0 %394, %v344
    %v396 = vpop.permute.xlu0 %395
    %399 = vset.pattern.permute.xlu0 0
    %400 = vperm.xlu0 %399, %v345
    %v401 = vpop.permute.xlu0 %400
    %404 = vset.pattern.permute.xlu0 0
    %405 = vperm.xlu0 %404, %v346
    %v406 = vpop.permute.xlu0 %405
    %409 = vset.pattern.permute.xlu0 0
    %410 = vperm.xlu0 %409, %v347
    %v411 = vpop.permute.xlu0 %410
    %414 = vset.pattern.permute.xlu0 0
    %415 = vperm.xlu0 %414, %v348
    %v416 = vpop.permute.xlu0 %415
    %419 = vset.pattern.permute.xlu0 0
    %420 = vperm.xlu0 %419, %v349
    %v421 = vpop.permute.xlu0 %420
    %424 = vset.pattern.permute.xlu0 0
    %425 = vperm.xlu0 %424, %v350
    %v426 = vpop.permute.xlu0 %425
    %429 = vset.pattern.permute.xlu0 0
    %430 = vperm.xlu0 %429, %v351
    %v431 = vpop.permute.xlu0 %430
    %v434 = vlaneseq
    %v435 = vshrl.u32 %v434, 7
    %v436 = vsub.s32 0, %v435
    %v437 = vrot.slane %v352, %v436
    %v439 = vadd.f32 %v356, %v437
    %v440 = vadd.f32 %v361, %v437
    %v441 = vadd.f32 %v366, %v437
    %v442 = vadd.f32 %v371, %v437
    %v443 = vadd.f32 %v376, %v437
    %v444 = vadd.f32 %v381, %v437
    %v445 = vadd.f32 %v386, %v437
    %v446 = vadd.f32 %v391, %v437
    %v447 = vadd.f32 %v396, %v437
    %v448 = vadd.f32 %v401, %v437
    %v449 = vadd.f32 %v406, %v437
    %v450 = vadd.f32 %v411, %v437
    %v451 = vadd.f32 %v416, %v437
    %v452 = vadd.f32 %v421, %v437
    %v453 = vadd.f32 %v426, %v437
    %v454 = vadd.f32 %v431, %v437
    %v455 = vadd.f32 %v439, %v274
    %v456 = vadd.f32 %v440, %v277
    %v457 = vadd.f32 %v441, %v282
    %v458 = vadd.f32 %v442, %v285
    %v459 = vadd.f32 %v443, %v290
    %v460 = vadd.f32 %v444, %v293
    %v461 = vadd.f32 %v445, %v298
    %v462 = vadd.f32 %v446, %v301
    %v463 = vadd.f32 %v447, %v306
    %v464 = vadd.f32 %v448, %v309
    %v465 = vadd.f32 %v449, %v314
    %v466 = vadd.f32 %v450, %v317
    %v467 = vadd.f32 %v451, %v322
    %v468 = vadd.f32 %v452, %v325
    %v469 = vadd.f32 %v453, %v330
    %v470 = vadd.f32 %v454, %v333
    %v471 = vmin.f32 %v455, 0.0
    %v472 = vmin.f32 %v456, 0.0
    %v473 = vmin.f32 %v457, 0.0
    %v474 = vmin.f32 %v458, 0.0
    %v475 = vmin.f32 %v459, 0.0
    %v476 = vmin.f32 %v460, 0.0
    %v477 = vmin.f32 %v461, 0.0
    %v478 = vmin.f32 %v462, 0.0
    %v479 = vmin.f32 %v463, 0.0
    %v480 = vmin.f32 %v464, 0.0
    %v481 = vmin.f32 %v465, 0.0
    %v482 = vmin.f32 %v466, 0.0
    %v483 = vmin.f32 %v467, 0.0
    %v484 = vmin.f32 %v468, 0.0
    %v485 = vmin.f32 %v469, 0.0
    %v486 = vmin.f32 %v470, 0.0
    %v487 = vmul.f32 %v471, 1.442695
    %v488 = vpow.pop %v487
    %v489 = vmul.f32 %v472, 1.442695
    %v490 = vpow.pop %v489
    %v491 = vmul.f32 %v473, 1.442695
    %v492 = vpow.pop %v491
    %v493 = vmul.f32 %v474, 1.442695
    %v494 = vpow.pop %v493
    %v495 = vmul.f32 %v475, 1.442695
    %v496 = vpow.pop %v495
    %v497 = vmul.f32 %v476, 1.442695
    %v498 = vpow.pop %v497
    %v499 = vmul.f32 %v477, 1.442695
    %v500 = vpow.pop %v499
    %v501 = vmul.f32 %v478, 1.442695
    %v502 = vpow.pop %v501
    %v503 = vmul.f32 %v479, 1.442695
    %v504 = vpow.pop %v503
    %v505 = vmul.f32 %v480, 1.442695
    %v506 = vpow.pop %v505
    %v507 = vmul.f32 %v481, 1.442695
    %v508 = vpow.pop %v507
    %v509 = vmul.f32 %v482, 1.442695
    %v510 = vpow.pop %v509
    %v511 = vmul.f32 %v483, 1.442695
    %v512 = vpow.pop %v511
    %v513 = vmul.f32 %v484, 1.442695
    %v514 = vpow.pop %v513
    %v515 = vmul.f32 %v485, 1.442695
    %v516 = vpow.pop %v515
    %v517 = vmul.f32 %v486, 1.442695
    %v518 = vpow.pop %v517
    %v519 = vmul.f32 %v488, %v488
    %v520 = vmul.f32 %v490, %v490
    %v521 = vmul.f32 %v492, %v492
    %v522 = vmul.f32 %v494, %v494
    %v523 = vmul.f32 %v496, %v496
    %v524 = vmul.f32 %v498, %v498
    %v525 = vmul.f32 %v500, %v500
    %v526 = vmul.f32 %v502, %v502
    %v527 = vmul.f32 %v504, %v504
    %v528 = vmul.f32 %v506, %v506
    %v529 = vmul.f32 %v508, %v508
    %v530 = vmul.f32 %v510, %v510
    %v531 = vmul.f32 %v512, %v512
    %v532 = vmul.f32 %v514, %v514
    %v533 = vmul.f32 %v516, %v516
    %v534 = vmul.f32 %v518, %v518
    %v535 = vadd.f32 %v488, %v519
    %v536 = vadd.f32 %v490, %v520
    %v537 = vadd.f32 %v492, %v521
    %v538 = vadd.f32 %v494, %v522
    %v539 = vadd.f32 %v496, %v523
    %v540 = vadd.f32 %v498, %v524
    %v541 = vadd.f32 %v500, %v525
    %v542 = vadd.f32 %v502, %v526
    %v543 = vadd.f32 %v504, %v527
    %v544 = vadd.f32 %v506, %v528
    %v545 = vadd.f32 %v508, %v529
    %v546 = vadd.f32 %v510, %v530
    %v547 = vadd.f32 %v512, %v531
    %v548 = vadd.f32 %v514, %v532
    %v549 = vadd.f32 %v516, %v533
    %v550 = vadd.f32 %v518, %v534
    %v551 = vmul.f32 %v519, %v519
    %v552 = vmul.f32 %v520, %v520
    %v553 = vmul.f32 %v521, %v521
    %v554 = vmul.f32 %v522, %v522
    %v555 = vmul.f32 %v523, %v523
    %v556 = vmul.f32 %v524, %v524
    %v557 = vmul.f32 %v525, %v525
    %v558 = vmul.f32 %v526, %v526
    %v559 = vmul.f32 %v527, %v527
    %v560 = vmul.f32 %v528, %v528
    %v561 = vmul.f32 %v529, %v529
    %v562 = vmul.f32 %v530, %v530
    %v563 = vmul.f32 %v531, %v531
    %v564 = vmul.f32 %v532, %v532
    %v565 = vmul.f32 %v533, %v533
    %v566 = vmul.f32 %v534, %v534
    %v567 = vadd.f32 %v535, %v551
    %v568 = vadd.f32 %v536, %v552
    %v569 = vadd.f32 %v537, %v553
    %v570 = vadd.f32 %v538, %v554
    %v571 = vadd.f32 %v539, %v555
    %v572 = vadd.f32 %v540, %v556
    %v573 = vadd.f32 %v541, %v557
    %v574 = vadd.f32 %v542, %v558
    %v575 = vadd.f32 %v543, %v559
    %v576 = vadd.f32 %v544, %v560
    %v577 = vadd.f32 %v545, %v561
    %v578 = vadd.f32 %v546, %v562
    %v579 = vadd.f32 %v547, %v563
    %v580 = vadd.f32 %v548, %v564
    %v581 = vadd.f32 %v549, %v565
    %v582 = vadd.f32 %v550, %v566
    %v583 = vmul.f32 %v551, %v551
    %v584 = vmul.f32 %v552, %v552
    %v585 = vmul.f32 %v553, %v553
    %v586 = vmul.f32 %v554, %v554
    %v587 = vmul.f32 %v555, %v555
    %v588 = vmul.f32 %v556, %v556
    %v589 = vmul.f32 %v557, %v557
    %v590 = vmul.f32 %v558, %v558
    %v591 = vmul.f32 %v559, %v559
    %v592 = vmul.f32 %v560, %v560
    %v593 = vmul.f32 %v561, %v561
    %v594 = vmul.f32 %v562, %v562
    %v595 = vmul.f32 %v563, %v563
    %v596 = vmul.f32 %v564, %v564
    %v597 = vmul.f32 %v565, %v565
    %v598 = vmul.f32 %v566, %v566
    %v599 = vadd.f32 %v567, %v583
    %v600 = vadd.f32 %v568, %v584
    %v601 = vadd.f32 %v569, %v585
    %v602 = vadd.f32 %v570, %v586
    %v603 = vadd.f32 %v571, %v587
    %v604 = vadd.f32 %v572, %v588
    %v605 = vadd.f32 %v573, %v589
    %v606 = vadd.f32 %v574, %v590
    %v607 = vadd.f32 %v575, %v591
    %v608 = vadd.f32 %v576, %v592
    %v609 = vadd.f32 %v577, %v593
    %v610 = vadd.f32 %v578, %v594
    %v611 = vadd.f32 %v579, %v595
    %v612 = vadd.f32 %v580, %v596
    %v613 = vadd.f32 %v581, %v597
    %v614 = vadd.f32 %v582, %v598
    %v615 = vmul.f32 %v583, %v583
    %v616 = vmul.f32 %v584, %v584
    %v617 = vmul.f32 %v585, %v585
    %v618 = vmul.f32 %v586, %v586
    %v619 = vmul.f32 %v587, %v587
    %v620 = vmul.f32 %v588, %v588
    %v621 = vmul.f32 %v589, %v589
    %v622 = vmul.f32 %v590, %v590
    %v623 = vmul.f32 %v591, %v591
    %v624 = vmul.f32 %v592, %v592
    %v625 = vmul.f32 %v593, %v593
    %v626 = vmul.f32 %v594, %v594
    %v627 = vmul.f32 %v595, %v595
    %v628 = vmul.f32 %v596, %v596
    %v629 = vmul.f32 %v597, %v597
    %v630 = vmul.f32 %v598, %v598
    %v631 = vadd.f32 %v599, %v615
    %v632 = vadd.f32 %v600, %v616
    %v633 = vadd.f32 %v601, %v617
    %v634 = vadd.f32 %v602, %v618
    %v635 = vadd.f32 %v603, %v619
    %v636 = vadd.f32 %v604, %v620
    %v637 = vadd.f32 %v605, %v621
    %v638 = vadd.f32 %v606, %v622
    %v639 = vadd.f32 %v607, %v623
    %v640 = vadd.f32 %v608, %v624
    %v641 = vadd.f32 %v609, %v625
    %v642 = vadd.f32 %v610, %v626
    %v643 = vadd.f32 %v611, %v627
    %v644 = vadd.f32 %v612, %v628
    %v645 = vadd.f32 %v613, %v629
    %v646 = vadd.f32 %v614, %v630
    %v647 = vld [vmem:[%s131] sm:$0xff]
    %v648 = vld [vmem:[%s131 + $0x8] sm:$0xff]
    %v649 = vld [vmem:[%s131 + $0x10] sm:$0xff]
    %v650 = vld [vmem:[%s131 + $0x18] sm:$0xff]
    %v651 = vld [vmem:[%s131 + $0x20] sm:$0xff]
    %v652 = vld [vmem:[%s131 + $0x28] sm:$0xff]
    %v653 = vld [vmem:[%s131 + $0x30] sm:$0xff]
    %v654 = vld [vmem:[%s131 + $0x38] sm:$0xff]
    %v655 = vld [vmem:[%s131 + $0x40] sm:$0xff]
    %v656 = vld [vmem:[%s131 + $0x48] sm:$0xff]
    %v657 = vld [vmem:[%s131 + $0x50] sm:$0xff]
    %v658 = vld [vmem:[%s131 + $0x58] sm:$0xff]
    %v659 = vld [vmem:[%s131 + $0x60] sm:$0xff]
    %v660 = vld [vmem:[%s131 + $0x68] sm:$0xff]
    %v661 = vld [vmem:[%s131 + $0x70] sm:$0xff]
    %v662 = vld [vmem:[%s131 + $0x78] sm:$0xff]
    %664 = vset.pattern.permute.xlu0 0
    %665 = vperm.xlu0 %664, %v647
    %v666 = vpop.permute.xlu0 %665
    %669 = vset.pattern.permute.xlu0 0
    %670 = vperm.xlu0 %669, %v648
    %v671 = vpop.permute.xlu0 %670
    %674 = vset.pattern.permute.xlu0 0
    %675 = vperm.xlu0 %674, %v649
    %v676 = vpop.permute.xlu0 %675
    %679 = vset.pattern.permute.xlu0 0
    %680 = vperm.xlu0 %679, %v650
    %v681 = vpop.permute.xlu0 %680
    %684 = vset.pattern.permute.xlu0 0
    %685 = vperm.xlu0 %684, %v651
    %v686 = vpop.permute.xlu0 %685
    %689 = vset.pattern.permute.xlu0 0
    %690 = vperm.xlu0 %689, %v652
    %v691 = vpop.permute.xlu0 %690
    %694 = vset.pattern.permute.xlu0 0
    %695 = vperm.xlu0 %694, %v653
    %v696 = vpop.permute.xlu0 %695
    %699 = vset.pattern.permute.xlu0 0
    %700 = vperm.xlu0 %699, %v654
    %v701 = vpop.permute.xlu0 %700
    %704 = vset.pattern.permute.xlu0 0
    %705 = vperm.xlu0 %704, %v655
    %v706 = vpop.permute.xlu0 %705
    %709 = vset.pattern.permute.xlu0 0
    %710 = vperm.xlu0 %709, %v656
    %v711 = vpop.permute.xlu0 %710
    %714 = vset.pattern.permute.xlu0 0
    %715 = vperm.xlu0 %714, %v657
    %v716 = vpop.permute.xlu0 %715
    %719 = vset.pattern.permute.xlu0 0
    %720 = vperm.xlu0 %719, %v658
    %v721 = vpop.permute.xlu0 %720
    %724 = vset.pattern.permute.xlu0 0
    %725 = vperm.xlu0 %724, %v659
    %v726 = vpop.permute.xlu0 %725
    %729 = vset.pattern.permute.xlu0 0
    %730 = vperm.xlu0 %729, %v660
    %v731 = vpop.permute.xlu0 %730
    %734 = vset.pattern.permute.xlu0 0
    %735 = vperm.xlu0 %734, %v661
    %v736 = vpop.permute.xlu0 %735
    %739 = vset.pattern.permute.xlu0 0
    %740 = vperm.xlu0 %739, %v662
    %v741 = vpop.permute.xlu0 %740
    %v743 = vmul.f32 %v631, %v666
    %v744 = vmul.f32 %v632, %v671
    %v745 = vmul.f32 %v633, %v676
    %v746 = vmul.f32 %v634, %v681
    %v747 = vmul.f32 %v635, %v686
    %v748 = vmul.f32 %v636, %v691
    %v749 = vmul.f32 %v637, %v696
    %v750 = vmul.f32 %v638, %v701
    %v751 = vmul.f32 %v639, %v706
    %v752 = vmul.f32 %v640, %v711
    %v753 = vmul.f32 %v641, %v716
    %v754 = vmul.f32 %v642, %v721
    %v755 = vmul.f32 %v643, %v726
    %v756 = vmul.f32 %v644, %v731
    %v757 = vmul.f32 %v645, %v736
    %v758 = vmul.f32 %v646, %v741
    %v759 = vld [vmem:[%s137] sm:$0x1]
    %v761 = vlaneseq
    %v762 = vshrl.u32 %v761, 7
    %v763 = vsub.s32 0, %v762
    %v764 = vrot.slane %v759, %v763
    %v766 = vmul.f32 %v743, %v764
    %v767 = vmul.f32 %v744, %v764
    %v768 = vmul.f32 %v745, %v764
    %v769 = vmul.f32 %v746, %v764
    %v770 = vmul.f32 %v747, %v764
    %v771 = vmul.f32 %v748, %v764
    %v772 = vmul.f32 %v749, %v764
    %v773 = vmul.f32 %v750, %v764
    %v774 = vmul.f32 %v751, %v764
    %v775 = vmul.f32 %v752, %v764
    %v776 = vmul.f32 %v753, %v764
    %v777 = vmul.f32 %v754, %v764
    %v778 = vmul.f32 %v755, %v764
    %v779 = vmul.f32 %v756, %v764
    %v780 = vmul.f32 %v757, %v764
    %v781 = vmul.f32 %v758, %v764
    %v782 = vadd.f32 %v766, 0.0
    %v783 = vadd.f32 %v782, %v767
    %v784 = vadd.f32 %v783, %v768
    %v785 = vadd.f32 %v784, %v769
    %v786 = vadd.f32 %v785, %v770
    %v787 = vadd.f32 %v786, %v771
    %v788 = vadd.f32 %v787, %v772
    %v789 = vadd.f32 %v788, %v773
    %v790 = vadd.f32 %v789, %v774
    %v791 = vadd.f32 %v790, %v775
    %v792 = vadd.f32 %v791, %v776
    %v793 = vadd.f32 %v792, %v777
    %v794 = vadd.f32 %v793, %v778
    %v795 = vadd.f32 %v794, %v779
    %v796 = vadd.f32 %v795, %v780
    %v797 = vadd.f32 %v796, %v781
    %p798 = scmp.eq.s32.totalorder %s140, %s141
    %s799 = scalar_select %p798, 1.0, 2.0
    %v800 = vstv %s799
    %v801 = vmul.f32 %v797, %v800
    %802 = vst [vmem:[#allocation5] sm:$0xff] %v801
    // Predicated region
    $region26: #{tpu_custom_call.1} parent=1 // pred_check
      _
    $region27: #{tpu_custom_call.1} parent=1 // pred_check_branch
      %804 = sbr.rel (0) target = $region29
    $region28: #{tpu_custom_call.1} parent=1 // pred_region
      %s806 = ssub.s32 128, 128
      %807 = vsyncadd [#allocation6], %s806
      %s809 = sshll.u32 [#allocation5], 4
      %s810 = int_to_ptr.vmem [resolvable:$true] %s809
      %812 = dma.vmem_to_hbm [thread:$0]  %s810, 128, %s8, [#allocation6]
    $region29: #{tpu_custom_call.1} parent=1 // pred_fallthru
      _
    // Predicated region
    $region30: #{tpu_custom_call.1} parent=1 // pred_check
      _
    $region31: #{tpu_custom_call.1} parent=1 // pred_check_branch
      %814 = sbr.rel (0) target = $region33
    $region32: #{tpu_custom_call.1} parent=1 // pred_region
      %815 = dma.done [#allocation6], 128
    $region33: #{tpu_custom_call.1} parent=1 // pred_fallthru
      _
    %816 = vsyncpa [#allocation6], 1

</llo_original>
